<compile_context>
chip_gen: v7x
topology: tpu7x:2x2x1
jax: 0.10.0
libtpu: 0.0.40
codegen_flags: <defaults>
</compile_context>

<pallas_src>
import functools

import jax
import jax.numpy as jnp
from jax import lax
from jax.experimental import pallas as pl
from jax.experimental.pallas import tpu as pltpu

_SUB, _LANE = 8, 128          # one f32 vreg tile
_DISC_BLOCK = _SUB * _LANE    # 1024 discrete actions per refill
_CONT_ROWS = 128              # 128 continuous action vectors per refill

_ON_TPU = jax.default_backend() == "tpu"

_SMEM = pltpu.MemorySpace.SMEM
_VMEM = pltpu.MemorySpace.VMEM


def _bits_to_uniform(bits):
    """32-bit random bits -> float32 uniform in [0, 1) via the mantissa trick.

    Note: 23 mantissa bits means floor(u * n) has a tiny bias only when
    n approaches 2^23 buckets; negligible for any realistic action space.
    """
    u32 = lax.bitcast_convert_type(bits, jnp.uint32)
    mant = (u32 >> jnp.uint32(9)) | jnp.uint32(0x3F800000)   # 1.xxxx in [1, 2)
    return lax.bitcast_convert_type(mant, jnp.float32) - jnp.float32(1.0)


# ------------------- kernels: TPU hardware-PRNG path -------------------------

def _discrete_kernel_hw(seed_ref, out_ref, *, n_actions):
    # seed_ref: SMEM (2,) int32 (both raw key words); out_ref: VMEM (8,128) int32
    pltpu.prng_seed(seed_ref[0], seed_ref[1])
    u = _bits_to_uniform(pltpu.prng_random_bits(out_ref.shape))
    out_ref[...] = jnp.floor(u * jnp.float32(n_actions)).astype(jnp.int32)


def _continuous_kernel_hw(seed_ref, low_ref, rng_ref, out_ref):
    # seed_ref: SMEM (2,) int32; low/rng: VMEM (1,128) f32; out: VMEM (ROWS,128) f32
    pltpu.prng_seed(seed_ref[0], seed_ref[1])
    u = _bits_to_uniform(pltpu.prng_random_bits(out_ref.shape))
    out_ref[...] = low_ref[...] + u * rng_ref[...]


# ---------- kernels: portable fallback (random bits generated outside) -------

def _discrete_kernel_bits(bits_ref, out_ref, *, n_actions):
    u = _bits_to_uniform(bits_ref[...])
    out_ref[...] = jnp.floor(u * jnp.float32(n_actions)).astype(jnp.int32)


def _continuous_kernel_bits(bits_ref, low_ref, rng_ref, out_ref):
    u = _bits_to_uniform(bits_ref[...])
    out_ref[...] = low_ref[...] + u * rng_ref[...]


# ------------------------------ wrappers --------------------------------------

def _key_words_i32(key):
    """The two raw 32-bit key words as an int32 (2,) vector (no Threefry launch)."""
    if jnp.issubdtype(key.dtype, jax.dtypes.prng_key):
        data = jax.random.key_data(key)
    else:
        data = key
    return lax.bitcast_convert_type(
        data.reshape(-1)[:2].astype(jnp.uint32), jnp.int32
    )


@functools.partial(jax.jit, static_argnames=("n_actions",))
def sample_discrete_block(key, n_actions):
    """One fused dispatch -> (1024,) int32 uniform actions in [0, n_actions)."""
    out_shape = jax.ShapeDtypeStruct((_SUB, _LANE), jnp.int32)
    if _ON_TPU:
        out = pl.pallas_call(
            functools.partial(_discrete_kernel_hw, n_actions=int(n_actions)),
            out_shape=out_shape,
            in_specs=[pl.BlockSpec(memory_space=_SMEM)],
            out_specs=pl.BlockSpec(memory_space=_VMEM),
        )(_key_words_i32(key))
    else:
        bits = jax.random.bits(key, (_SUB, _LANE), dtype=jnp.uint32)
        out = pl.pallas_call(
            functools.partial(_discrete_kernel_bits, n_actions=int(n_actions)),
            out_shape=out_shape,
            in_specs=[pl.BlockSpec(memory_space=_VMEM)],
            out_specs=pl.BlockSpec(memory_space=_VMEM),
        )(bits)
    return out.reshape(-1)


@jax.jit
def sample_continuous_block(key, low_row, rng_row):
    """One fused dispatch -> (_CONT_ROWS, 128) f32; row r is one padded action."""
    out_shape = jax.ShapeDtypeStruct((_CONT_ROWS, _LANE), jnp.float32)
    if _ON_TPU:
        return pl.pallas_call(
            _continuous_kernel_hw,
            out_shape=out_shape,
            in_specs=[
                pl.BlockSpec(memory_space=_SMEM),
                pl.BlockSpec(memory_space=_VMEM),
                pl.BlockSpec(memory_space=_VMEM),
            ],
            out_specs=pl.BlockSpec(memory_space=_VMEM),
        )(_key_words_i32(key), low_row, rng_row)
    bits = jax.random.bits(key, (_CONT_ROWS, _LANE), dtype=jnp.uint32)
    return pl.pallas_call(
        _continuous_kernel_bits,
        out_shape=out_shape,
        in_specs=[
            pl.BlockSpec(memory_space=_VMEM),
            pl.BlockSpec(memory_space=_VMEM),
            pl.BlockSpec(memory_space=_VMEM),
        ],
        out_specs=pl.BlockSpec(memory_space=_VMEM),
    )(bits, low_row, rng_row)


# --------------------------- module equivalent --------------------------------

class _DiscreteSpace:
    def __init__(self, n):
        self.n = n


class _BoxSpace:
    def __init__(self, low, high):
        self.low = jnp.asarray(low, jnp.float32)
        self.high = jnp.asarray(high, jnp.float32)


class _Env:
    def __init__(self, action_space):
        self.action_space = action_space


class RandomPolicy:
    """JAX/Pallas equivalent of the PyTorch RandomPolicy module.

    forward(state) ignores `state` and returns one uniform random action.
    Actions are generated in large device-side blocks (one pallas_call per
    block) and consumed one per call.
    """

    def __init__(self, env, discrete_action_space=True, key=None):
        self.env = env
        self.discrete_action_space = discrete_action_space
        self._key = key if key is not None else jax.random.PRNGKey(0)
        self._buf = None
        self._idx = 0
        if discrete_action_space:
            self._n = int(env.action_space.n)
            self._block = _DISC_BLOCK
        else:
            low = jnp.asarray(env.action_space.low, jnp.float32).reshape(-1)
            high = jnp.asarray(env.action_space.high, jnp.float32).reshape(-1)
            self._a_dim = int(low.shape[0])
            assert self._a_dim <= _LANE, "action_dim must fit one lane row (<=128)"
            # Constant bound rows, built ONCE (hoisted out of the hot path).
            self._low_row = (
                jnp.zeros((1, _LANE), jnp.float32).at[0, : self._a_dim].set(low)
            )
            self._rng_row = (
                jnp.zeros((1, _LANE), jnp.float32).at[0, : self._a_dim].set(high - low)
            )
            self._block = _CONT_ROWS

    def _refill(self):
        self._key, sub = jax.random.split(self._key)
        if self.discrete_action_space:
            self._buf = sample_discrete_block(sub, self._n)                 # (1024,)
        else:
            self._buf = sample_continuous_block(sub, self._low_row, self._rng_row)
        self._idx = 0

    def __call__(self, state):
        del state  # accepted and ignored, matching the reference forward()
        if self._buf is None or self._idx >= self._block:
            self._refill()
        i = self._idx
        self._idx += 1
        if self.discrete_action_space:
            return self._buf[i]                       # scalar int32
        return self._buf[i, : self._a_dim]            # (action_dim,) float32

    forward = __call__


if __name__ == "__main__":
    key = jax.random.PRNGKey(0)
    k_state, k_pol_d, k_pol_c = jax.random.split(key, 3)

    # layout: state is NCHW (B=2, C=4, H=16, W=16); accepted and ignored.
    state = jax.random.normal(k_state, (2, 4, 16, 16), dtype=jnp.float32)

    # Discrete action space with 6 actions.
    disc_env = _Env(_DiscreteSpace(n=6))
    disc_policy = RandomPolicy(disc_env, discrete_action_space=True, key=k_pol_d)
    a_disc = jax.block_until_ready(disc_policy(state))
    assert a_disc.dtype == jnp.int32
    assert 0 <= int(a_disc) < 6
    # Subsequent calls are served from the device-side buffer (no new kernel).
    for _ in range(5):
        a = int(disc_policy(state))
        assert 0 <= a < 6

    # Continuous (Box) action space with action_dim=6 in [-1, 1].
    cont_env = _Env(_BoxSpace(low=-jnp.ones((6,)), high=jnp.ones((6,))))
    cont_policy = RandomPolicy(cont_env, discrete_action_space=False, key=k_pol_c)
    a_cont = jax.block_until_ready(cont_policy(state))
    assert a_cont.shape == (6,) and a_cont.dtype == jnp.float32
    assert bool(jnp.all(a_cont >= -1.0) & jnp.all(a_cont <= 1.0))
    for _ in range(5):
        a_cont = cont_policy(state)
        assert bool(jnp.all(a_cont >= -1.0) & jnp.all(a_cont <= 1.0))

    print("KERNEL_OK")
</pallas_src>

<mosaic_0001>
module attributes {stable_mosaic.version = 11 : i64} {
  func.func @_discrete_kernel_bits(%arg0: memref<8x128xi32, #tpu.memory_space<vmem>>, %arg1: memref<8x128xi32, #tpu.memory_space<vmem>>) attributes {dimension_semantics = [], scalar_prefetch = 0 : i64, scratch_operands = 0 : i64, tpu.core_type = #tpu.core_type<tc>} {
    %c0 = arith.constant 0 : index
    %c0_0 = arith.constant 0 : index
    %0 = vector.load %arg0[%c0, %c0_0] : memref<8x128xi32, #tpu.memory_space<vmem>>, vector<8x128xi32>
    %1 = tpu.bitcast %0 : vector<8x128xi32> -> vector<8x128xi32>
    %c9_i32 = arith.constant 9 : i32
    %2 = vector.broadcast %c9_i32 : i32 to vector<8x128xi32>
    %3 = arith.shrui %1, %2 : vector<8x128xi32>
    %c1065353216_i32 = arith.constant 1065353216 : i32
    %4 = vector.broadcast %c1065353216_i32 : i32 to vector<8x128xi32>
    %5 = arith.ori %3, %4 : vector<8x128xi32>
    %6 = tpu.bitcast %5 : vector<8x128xi32> -> vector<8x128xf32>
    %cst = arith.constant 1.000000e+00 : f32
    %7 = vector.broadcast %cst : f32 to vector<8x128xf32>
    %8 = arith.subf %6, %7 : vector<8x128xf32>
    %cst_1 = arith.constant 6.000000e+00 : f32
    %9 = vector.broadcast %cst_1 : f32 to vector<8x128xf32>
    %10 = arith.mulf %8, %9 : vector<8x128xf32>
    %11 = math.floor %10 : vector<8x128xf32>
    %12 = arith.fptosi %11 : vector<8x128xf32> to vector<8x128xi32>
    %c0_2 = arith.constant 0 : index
    %c0_3 = arith.constant 0 : index
    %13 = vector.load %arg1[%c0_2, %c0_3] : memref<8x128xi32, #tpu.memory_space<vmem>>, vector<8x128xi32>
    tpu.vector_store %arg1[%c0_2, %c0_3], %12 {strides = array<i32>} : memref<8x128xi32, #tpu.memory_space<vmem>>, vector<8x128xi32>,
    return
  }
}

</mosaic_0001>

<llo_original>
// kernel: sample_discrete_block.1
$region0: #{sample_discrete_block.1}
  #allocation0 [shape = 'u32[]', space=smem, size = 0x4, offset = 0x4, fixed_abs, tag = 'smem constant byte address 0x4 - core index']
  #allocation1 [shape = 'u32[144,128]{1,0:T(1,128)}', space=vmem, size = 0x12000, scoped, tag = 'internal scratch']
  %s0 = inlined_call_operand.vmem [shape: u32[8,128], index: 0, kind: input, shape index: {}]
  %s1 = inlined_call_operand.hbm [shape: s32[8,128], index: 1, kind: output, shape index: {}]
  %s2 = sld [smem:[#allocation0]]
  $region14: #{sample_discrete_block.1} parent=0
    _
  %s4 = ssub.s32 1, %s2
  %s5 = scalar_select 0, %s4, %s2
  $region1: #{sample_discrete_block.1} parent=0
    #allocation2 [shape = 'u8[4096]{0}', space=vmem, size = 0x1000, scoped, tag = 'output window, operand 0, single buffered']
    #allocation3 [shape = 's32[1]{0}', space=sflag, size = 0x4, scoped, tag = 'scoped memory for sample_discrete_block.1']
    %6 = vsyncpa [#allocation3], 0
    // Predicated region
    $region2: #{sample_discrete_block.1} parent=1 // pred_check
      _
    $region3: #{sample_discrete_block.1} parent=1 // pred_check_branch
      %8 = sbr.rel (0) target = $region5
    $region4: #{sample_discrete_block.1} parent=1 // pred_region
      _
    $region5: #{sample_discrete_block.1} parent=1 // pred_fallthru
      _
    %v9 = vld [vmem:[%s0] sm:$0xff]
    %v10 = vshrl.u32 %v9, 9
    %v11 = vor.u32 %v10, 1065353216
    %v13 = vsub.f32 %v11, 1.0
    %v14 = vmul.f32 %v13, 6.0
    %v15 = vfloor.f32 %v14
    %v16 = vcvt.f32.s32.to.zero.pseudo %v15
    %17 = vst [vmem:[#allocation2] sm:$0xff] %v16
    // Predicated region
    $region6: #{sample_discrete_block.1} parent=1 // pred_check
      _
    $region7: #{sample_discrete_block.1} parent=1 // pred_check_branch
      %19 = sbr.rel (0) target = $region9
    $region8: #{sample_discrete_block.1} parent=1 // pred_region
      %s21 = ssub.s32 128, 128
      %22 = vsyncadd [#allocation3], %s21
      %s24 = sshll.u32 [#allocation2], 4
      %s25 = int_to_ptr.vmem [resolvable:$true] %s24
      %27 = dma.vmem_to_hbm [thread:$0]  %s25, 128, %s1, [#allocation3]
    $region9: #{sample_discrete_block.1} parent=1 // pred_fallthru
      _
    // Predicated region
    $region10: #{sample_discrete_block.1} parent=1 // pred_check
      _
    $region11: #{sample_discrete_block.1} parent=1 // pred_check_branch
      %29 = sbr.rel (0) target = $region13
    $region12: #{sample_discrete_block.1} parent=1 // pred_region
      %30 = dma.done [#allocation3], 128
    $region13: #{sample_discrete_block.1} parent=1 // pred_fallthru
      _
    %31 = vsyncpa [#allocation3], 1

</llo_original>
